<compile_context>
chip_gen: v7x
topology: tpu7x:2x2x1
jax: 0.10.0
libtpu: 0.0.40
codegen_flags: <defaults>
</compile_context>

<pallas_src>
import jax
import jax.numpy as jnp
from jax.experimental import pallas as pl
from jax.experimental.pallas import tpu as pltpu


def _delta_kernel(imgs_ref, delta_ref, out_ref):
    # Elementwise hot path on the VPU: x + delta, clamped to [0, 1].
    out_ref[...] = jnp.clip(imgs_ref[...] + delta_ref[...], 0.0, 1.0)


# Prefer 1024 lanes (2 MiB tiles with 512 rows); any multiple of 128 is legal.
_LANE_CANDIDATES = (1024, 512, 256, 128)
_TILE_ROWS = 512


def delta_forward(imgs, xform_params, *, donate_imgs=False):
    """Apply the Delta attack layer: clamp(imgs + xform_params, 0, 1).

    imgs, xform_params: float32 arrays of identical NCHW shape.
    donate_imgs: if True, alias the imgs buffer to the output (caller must not
    reuse imgs afterwards).
    """
    assert imgs.shape == xform_params.shape
    orig_shape = imgs.shape
    n = imgs.size

    # Pick a lane-dense column width (multiple of 128) that divides N exactly.
    lane_cols = None
    for cand in _LANE_CANDIDATES:
        if n % cand == 0:
            lane_cols = cand
            break
    pad = 0
    if lane_cols is None:
        # Rare fallback: pad the flat array up to a multiple of 128 lanes.
        lane_cols = 128
        pad = (-n) % lane_cols

    imgs_flat = imgs.reshape(-1)
    delta_flat = xform_params.reshape(-1)
    if pad:
        imgs_flat = jnp.pad(imgs_flat, (0, pad))
        delta_flat = jnp.pad(delta_flat, (0, pad))

    rows = (n + pad) // lane_cols
    imgs2d = imgs_flat.reshape(rows, lane_cols)
    delta2d = delta_flat.reshape(rows, lane_cols)

    # Row tile: 512 (multiple of 8) when the slab is big enough; otherwise the
    # full row extent (always a legal block shape). Non-divisible row counts
    # are handled by Pallas partial edge blocks via pl.cdiv.
    tile_rows = _TILE_ROWS if rows >= _TILE_ROWS else rows
    grid = (pl.cdiv(rows, tile_rows),)

    out2d = pl.pallas_call(
        _delta_kernel,
        out_shape=jax.ShapeDtypeStruct((rows, lane_cols), jnp.float32),
        grid=grid,
        in_specs=[
            pl.BlockSpec((tile_rows, lane_cols), lambda i: (i, 0)),
            pl.BlockSpec((tile_rows, lane_cols), lambda i: (i, 0)),
        ],
        out_specs=pl.BlockSpec((tile_rows, lane_cols), lambda i: (i, 0)),
        compiler_params=pltpu.CompilerParams(
            dimension_semantics=("parallel",),
        ),
        input_output_aliases=({0: 0} if donate_imgs else {}),
    )(imgs2d, delta2d)

    out_flat = out2d.reshape(-1)
    if pad:
        out_flat = out_flat[:n]
    return out_flat.reshape(orig_shape)


def make_delta_params(batch_shape, linf_budget=4 / 255, random_init=False, key=None):
    """Construct xform_params as in Delta.__init__."""
    if random_init:
        assert key is not None
        return jax.random.uniform(
            key, batch_shape, dtype=jnp.float32,
            minval=-linf_budget, maxval=linf_budget,
        )
    # Default init: copy of identity_params (zeros).
    # Note: if the caller statically knows params are zero, skip the kernel and
    # return jnp.clip(imgs, 0, 1) -- the only way to beat the HBM roofline.
    return jnp.zeros(batch_shape, dtype=jnp.float32)


if __name__ == "__main__":
    key = jax.random.PRNGKey(0)
    k_img, k_param = jax.random.split(key)

    batch_shape = (2, 4, 16, 16)  # (B, C, H, W)
    imgs = jax.random.uniform(k_img, batch_shape, dtype=jnp.float32)

    # random_init=True so the kernel actually exercises the add + clamp.
    xform_params = make_delta_params(
        batch_shape, linf_budget=4 / 255, random_init=True, key=k_param
    )

    out = delta_forward(imgs, xform_params)
    out = jax.block_until_ready(out)

    # Reference check against plain JAX.
    ref = jnp.clip(imgs + xform_params, 0.0, 1.0)
    assert out.shape == batch_shape
    assert jnp.allclose(out, ref, atol=1e-6), "mismatch vs reference"

    print("KERNEL_OK")
</pallas_src>

<mosaic_0001>
module attributes {stable_mosaic.version = 11 : i64} {
  func.func @_delta_kernel(%arg0: i32, %arg1: memref<2x1024xf32, #tpu.memory_space<vmem>>, %arg2: memref<2x1024xf32, #tpu.memory_space<vmem>>, %arg3: memref<2x1024xf32, #tpu.memory_space<vmem>>) attributes {dimension_semantics = [#tpu.dimension_semantics<parallel>], iteration_bounds = array<i64: 1>, scalar_prefetch = 0 : i64, scratch_operands = 0 : i64, tpu.core_type = #tpu.core_type<tc>, window_params = [{transform_indices = @transform_0, window_bounds = array<i64: 2, 1024>}, {transform_indices = @transform_1, window_bounds = array<i64: 2, 1024>}, {transform_indices = @transform_2, window_bounds = array<i64: 2, 1024>}]} {
    %c0 = arith.constant 0 : index
    %c0_0 = arith.constant 0 : index
    %0 = vector.load %arg1[%c0, %c0_0] : memref<2x1024xf32, #tpu.memory_space<vmem>>, vector<2x1024xf32>
    %c0_1 = arith.constant 0 : index
    %c0_2 = arith.constant 0 : index
    %1 = vector.load %arg2[%c0_1, %c0_2] : memref<2x1024xf32, #tpu.memory_space<vmem>>, vector<2x1024xf32>
    %2 = arith.addf %0, %1 : vector<2x1024xf32>
    %cst = arith.constant 0.000000e+00 : f32
    %cst_3 = arith.constant 1.000000e+00 : f32
    %3 = vector.broadcast %cst : f32 to vector<2x1024xf32>
    %4 = arith.maximumf %3, %2 : vector<2x1024xf32>
    %5 = vector.broadcast %cst_3 : f32 to vector<2x1024xf32>
    %6 = arith.minimumf %5, %4 : vector<2x1024xf32>
    %c0_4 = arith.constant 0 : index
    %c0_5 = arith.constant 0 : index
    %7 = vector.load %arg3[%c0_4, %c0_5] : memref<2x1024xf32, #tpu.memory_space<vmem>>, vector<2x1024xf32>
    tpu.vector_store %arg3[%c0_4, %c0_5], %6 {strides = array<i32>} : memref<2x1024xf32, #tpu.memory_space<vmem>>, vector<2x1024xf32>,
    return
  }
  func.func @transform_0(%arg0: i32) -> (i32, i32) {
    %c0_i32 = arith.constant 0 : i32
    %c0_i32_0 = arith.constant 0 : i32
    return %arg0, %c0_i32 : i32, i32
  }
  func.func @transform_1(%arg0: i32) -> (i32, i32) {
    %c0_i32 = arith.constant 0 : i32
    %c0_i32_0 = arith.constant 0 : i32
    return %arg0, %c0_i32 : i32, i32
  }
  func.func @transform_2(%arg0: i32) -> (i32, i32) {
    %c0_i32 = arith.constant 0 : i32
    %c0_i32_0 = arith.constant 0 : i32
    return %arg0, %c0_i32 : i32, i32
  }
}

</mosaic_0001>

<llo_original>
// kernel: tpu_custom_call.1
$region0: #{tpu_custom_call.1}
  #allocation0 [shape = 'u32[]', space=smem, size = 0x4, offset = 0x4, fixed_abs, tag = 'smem constant byte address 0x4 - core index']
  #allocation1 [shape = 'u32[144,128]{1,0:T(1,128)}', space=vmem, size = 0x12000, scoped, tag = 'internal scratch']
  %s0 = inlined_call_operand.hbm [shape: f32[2,1024], index: 0, kind: input, shape index: {}]
  %s1 = inlined_call_operand.hbm [shape: f32[2,1024], index: 1, kind: input, shape index: {}]
  %s2 = inlined_call_operand.hbm [shape: f32[2,1024], index: 2, kind: output, shape index: {}]
  %s3 = sld [smem:[#allocation0]]
  $region26: #{tpu_custom_call.1} parent=0
    _
  %s5 = ssub.s32 1, %s3
  %s6 = scalar_select 0, %s5, %s3
  $region1: #{tpu_custom_call.1} parent=0
    #allocation2 [shape = 'u8[8192]{0}', space=vmem, size = 0x2000, scoped, tag = 'input window, operand 0, single buffered']
    #allocation3 [shape = 's32[1]{0}', space=sflag, size = 0x4, scoped, tag = 'scoped memory for tpu_custom_call.1']
    #allocation4 [shape = 's32[1]{0}', space=sflag, size = 0x4, scoped, tag = 'scoped memory for tpu_custom_call.1']
    #allocation5 [shape = 'u8[8192]{0}', space=vmem, size = 0x2000, scoped, tag = 'input window, operand 1, single buffered']
    #allocation6 [shape = 's32[1]{0}', space=sflag, size = 0x4, scoped, tag = 'scoped memory for tpu_custom_call.1']
    #allocation7 [shape = 'u8[8192]{0}', space=vmem, size = 0x2000, scoped, tag = 'output window, operand 0, single buffered']
    %7 = vsyncpa [#allocation3], 0
    %8 = vsyncpa [#allocation6], 0
    %9 = vsyncpa [#allocation4], 0
    // Predicated region
    $region2: #{tpu_custom_call.1} parent=1 // pred_check
      _
    $region3: #{tpu_custom_call.1} parent=1 // pred_check_branch
      %11 = sbr.rel (0) target = $region5
    $region4: #{tpu_custom_call.1} parent=1 // pred_region
      %s13 = ssub.s32 256, 256
      %14 = vsyncadd [#allocation3], %s13
      %s16 = sshll.u32 [#allocation2], 4
      %s17 = int_to_ptr.vmem [resolvable:$true] %s16
      %19 = dma.hbm_to_vmem [thread:$0]  %s0, 256, %s17, [#allocation3]
    $region5: #{tpu_custom_call.1} parent=1 // pred_fallthru
      _
    // Predicated region
    $region6: #{tpu_custom_call.1} parent=1 // pred_check
      _
    $region7: #{tpu_custom_call.1} parent=1 // pred_check_branch
      %21 = sbr.rel (0) target = $region9
    $region8: #{tpu_custom_call.1} parent=1 // pred_region
      %s23 = ssub.s32 256, 256
      %24 = vsyncadd [#allocation6], %s23
      %s26 = sshll.u32 [#allocation5], 4
      %s27 = int_to_ptr.vmem [resolvable:$true] %s26
      %29 = dma.hbm_to_vmem [thread:$0]  %s1, 256, %s27, [#allocation6]
    $region9: #{tpu_custom_call.1} parent=1 // pred_fallthru
      _
    // Predicated region
    $region10: #{tpu_custom_call.1} parent=1 // pred_check
      _
    $region11: #{tpu_custom_call.1} parent=1 // pred_check_branch
      %31 = sbr.rel (0) target = $region13
    $region12: #{tpu_custom_call.1} parent=1 // pred_region
      %32 = dma.done [#allocation3], 256
    $region13: #{tpu_custom_call.1} parent=1 // pred_fallthru
      _
    // Predicated region
    $region14: #{tpu_custom_call.1} parent=1 // pred_check
      _
    $region15: #{tpu_custom_call.1} parent=1 // pred_check_branch
      %34 = sbr.rel (0) target = $region17
    $region16: #{tpu_custom_call.1} parent=1 // pred_region
      %35 = dma.done [#allocation6], 256
    $region17: #{tpu_custom_call.1} parent=1 // pred_fallthru
      _
    %v36 = vld [vmem:[#allocation2] sm:$0xff]
    %v37 = vld [vmem:[#allocation2 + $0x8] sm:$0xff]
    %v38 = vld [vmem:[#allocation5] sm:$0xff]
    %v39 = vld [vmem:[#allocation5 + $0x8] sm:$0xff]
    %v40 = vadd.f32 %v36, %v38
    %v41 = vadd.f32 %v37, %v39
    %v42 = vmax.f32 %v40, 0.0
    %v43 = vmax.f32 %v41, 0.0
    %v44 = vmin.f32 %v42, 1.0
    %v45 = vmin.f32 %v43, 1.0
    %46 = vst [vmem:[#allocation7] sm:$0xff] %v44
    %47 = vst [vmem:[#allocation7 + $0x8] sm:$0xff] %v45
    // Predicated region
    $region18: #{tpu_custom_call.1} parent=1 // pred_check
      _
    $region19: #{tpu_custom_call.1} parent=1 // pred_check_branch
      %49 = sbr.rel (0) target = $region21
    $region20: #{tpu_custom_call.1} parent=1 // pred_region
      %s51 = ssub.s32 256, 256
      %52 = vsyncadd [#allocation4], %s51
      %s54 = sshll.u32 [#allocation7], 4
      %s55 = int_to_ptr.vmem [resolvable:$true] %s54
      %57 = dma.vmem_to_hbm [thread:$0]  %s55, 256, %s2, [#allocation4]
    $region21: #{tpu_custom_call.1} parent=1 // pred_fallthru
      _
    // Predicated region
    $region22: #{tpu_custom_call.1} parent=1 // pred_check
      _
    $region23: #{tpu_custom_call.1} parent=1 // pred_check_branch
      %59 = sbr.rel (0) target = $region25
    $region24: #{tpu_custom_call.1} parent=1 // pred_region
      %60 = dma.done [#allocation4], 256
    $region25: #{tpu_custom_call.1} parent=1 // pred_fallthru
      _
    %61 = vsyncpa [#allocation3], 1
    %62 = vsyncpa [#allocation6], 1
    %63 = vsyncpa [#allocation4], 1

</llo_original>
